<compile_context>
chip_gen: v6e
topology: v6e:2x2x1
jax: 0.10.0
libtpu: 0.0.40
codegen_flags: <defaults>
</compile_context>

<pallas_src>
import functools

import jax
import jax.numpy as jnp
from jax.experimental import pallas as pl
from jax.experimental.pallas import tpu as pltpu


def ca_kernel(x_ref, y_ref, w1a_ref, w1m_ref, w2_ref, out_ref,
              sum_acc, max_acc, *, inv_hw, hw, thw):
    hw_idx = pl.program_id(1)
    n_hw = pl.num_programs(1)

    x = x_ref[0].astype(jnp.float32)          # (C, THW) -- f32 accumulation
    y = y_ref[0].astype(jnp.float32)
    C = x.shape[0]

    @pl.when(hw_idx == 0)
    def _init():
        sum_acc[...] = jnp.zeros(sum_acc.shape, sum_acc.dtype)
        max_acc[...] = jnp.full(max_acc.shape, -jnp.inf, max_acc.dtype)

    def _accumulate(xs, ys, xm, ym):
        # Narrow per-step partials: the lane reduction folds THW/128 columns
        # with VPU adds/maxes and finishes with one XLU cross-lane reduce per
        # row; only a (C, 1) partial is read-modify-written to scratch.
        sum_acc[0:C, :] = sum_acc[0:C, :] + jnp.sum(xs, axis=-1, keepdims=True)
        sum_acc[C:2 * C, :] = (sum_acc[C:2 * C, :]
                               + jnp.sum(ys, axis=-1, keepdims=True))
        max_acc[0:C, :] = jnp.maximum(max_acc[0:C, :],
                                      jnp.max(xm, axis=-1, keepdims=True))
        max_acc[C:2 * C, :] = jnp.maximum(max_acc[C:2 * C, :],
                                          jnp.max(ym, axis=-1, keepdims=True))

    if hw % thw != 0:
        # Non-divisible HW: grid covers cdiv(HW, THW) tiles; out-of-range
        # lanes of the last tile contribute 0 to the sum and -inf to the max.
        # Masking is gated to the last step so full tiles stay on the cheap path.
        is_last = hw_idx == n_hw - 1

        @pl.when(jnp.logical_not(is_last))
        def _acc_full():
            _accumulate(x, y, x, y)

        @pl.when(is_last)
        def _acc_masked():
            lane = jax.lax.broadcasted_iota(jnp.int32, x.shape, 1)
            valid = hw - hw_idx * thw
            mask = lane < valid
            _accumulate(jnp.where(mask, x, 0.0), jnp.where(mask, y, 0.0),
                        jnp.where(mask, x, -jnp.inf), jnp.where(mask, y, -jnp.inf))
    else:
        _accumulate(x, y, x, y)

    @pl.when(hw_idx == n_hw - 1)
    def _finalize():
        pooled_avg = sum_acc[...] * inv_hw                   # (2C, 1)
        pooled_max = max_acc[...]                            # (2C, 1)

        # fc1 (1x1 conv, weights in (Cout, Cin) layout) + ReLU.
        avg_h = jnp.maximum(
            jnp.dot(w1a_ref[...], pooled_avg,
                    preferred_element_type=jnp.float32), 0.0)    # (hidden, 1)
        max_h = jnp.maximum(
            jnp.dot(w1m_ref[...], pooled_max,
                    preferred_element_type=jnp.float32), 0.0)    # (hidden, 1)

        # NOTE: this module feeds (avg_h + max_h) to BOTH fc2 branches
        # (avg_xy == max_xy after the cross-add), so fc2 folds into a single
        # matmul with w2 = wa2 + wm2 (folded in the wrapper).  This fold is
        # NOT valid for standard CBAM (fc2a(avg_h) + fc2m(max_h)).
        h = avg_h + max_h
        logits = jnp.dot(w2_ref[...], h,
                         preferred_element_type=jnp.float32)     # (C, 1)
        out_ref[0] = jax.nn.sigmoid(logits).astype(out_ref.dtype)


def _round_up(v, m):
    return (v + m - 1) // m * m


def _vmem_limit_bytes():
    """Generation-aware VMEM limit: ~3/4 of physical VMEM, capped at 96 MiB
    (v5e/v6e: 128 MiB physical; v7x: 64 MiB per TensorCore -> ~48 MiB)."""
    try:
        cap = int(pltpu.get_tpu_info().vmem_capacity_bytes)
        if cap <= 0:
            raise ValueError(cap)
    except Exception:
        cap = 64 * 1024 * 1024        # conservative fallback (v7x-sized)
    return min(96 * 1024 * 1024, (cap * 3) // 4)


def _choose_hw_tile(HW, C, itemsize, vmem_limit,
                    target_step_bytes=8 * 1024 * 1024, max_lanes=32768):
    """Largest lane-dense (multiple-of-128) spatial tile such that
    (a) the double-buffered x/y pipeline uses at most ~half the VMEM limit,
    (b) each grid step streams ~target_step_bytes of input (amortizes the
        ~0.35us per-step overhead; matters most on v7x), and
    (c) per-step reduce codegen stays bounded (max_lanes)."""
    hw_padded = _round_up(HW, 128)
    per_lane_pipeline = 4 * C * itemsize            # 2 tensors x 2 buffers
    vmem_lanes = max(128, (((vmem_limit // 2) // per_lane_pipeline) // 128) * 128)
    per_lane_step = 2 * C * itemsize                # x + y bytes per lane
    want_lanes = _round_up(max(128, target_step_bytes // per_lane_step), 128)
    thw = min(hw_padded, vmem_lanes, want_lanes, max_lanes)
    return max(thw, 128)


def ca_forward(x, y, wa1, wa2, wm1, wm2, hw_tile=None):
    """x, y: (B, C, H, W) float32 or bfloat16.  Weights in PyTorch Conv2d
    layout (Cout, Cin, 1, 1), bias=False.  Returns (B, C, 1, 1) channel map."""
    B, C, H, W = x.shape
    HW = H * W
    x2 = x.reshape(B, C, HW)
    y2 = y.reshape(B, C, HW)

    hidden = wa1.shape[0]
    # squeeze 1x1 conv weights, keep (Cout, Cin) layout (no transposes needed)
    w1a = wa1[:, :, 0, 0].astype(jnp.float32)                 # (hidden, 2C)
    w1m = wm1[:, :, 0, 0].astype(jnp.float32)                 # (hidden, 2C)
    w2 = (wa2[:, :, 0, 0] + wm2[:, :, 0, 0]).astype(jnp.float32)  # folded fc2

    itemsize = jnp.dtype(x.dtype).itemsize
    vmem_limit = _vmem_limit_bytes()

    thw = (_choose_hw_tile(HW, C, itemsize, vmem_limit)
           if hw_tile is None else int(hw_tile))
    if thw >= HW:
        thw = HW          # whole spatial extent in one (full-dim) block
    assert thw == HW or thw % 128 == 0, (HW, thw)
    n_hw = pl.cdiv(HW, thw)

    kernel = functools.partial(ca_kernel, inv_hw=float(1.0 / HW), hw=HW, thw=thw)

    in_specs = [
        pl.BlockSpec((1, C, thw), lambda b, h: (b, 0, h)),      # x tile
        pl.BlockSpec((1, C, thw), lambda b, h: (b, 0, h)),      # y tile
        pl.BlockSpec((hidden, 2 * C), lambda b, h: (0, 0)),     # fc1 avg weight
        pl.BlockSpec((hidden, 2 * C), lambda b, h: (0, 0)),     # fc1 max weight
        pl.BlockSpec((C, hidden), lambda b, h: (0, 0)),         # folded fc2 weight
    ]
    out_spec = pl.BlockSpec((1, C, 1), lambda b, h: (b, 0, 0))

    cost = pl.CostEstimate(
        flops=int(B * (4 * C * HW + 4 * hidden * 2 * C + 2 * C * hidden)),
        transcendentals=int(B * C),
        bytes_accessed=int(2 * B * C * HW * itemsize
                           + (2 * hidden * 2 * C + C * hidden) * 4
                           + B * C * itemsize),
    )

    out = pl.pallas_call(
        kernel,
        out_shape=jax.ShapeDtypeStruct((B, C, 1), x.dtype),
        grid=(B, n_hw),
        in_specs=in_specs,
        out_specs=out_spec,
        scratch_shapes=[
            pltpu.VMEM((2 * C, 1), jnp.float32),   # running sum (x rows, y rows)
            pltpu.VMEM((2 * C, 1), jnp.float32),   # running max (x rows, y rows)
        ],
        compiler_params=pltpu.CompilerParams(
            dimension_semantics=("parallel", "arbitrary"),
            vmem_limit_bytes=int(vmem_limit)),
        cost_estimate=cost,
    )(x2, y2, w1a, w1m, w2)
    return out.reshape(B, C, 1, 1)


def ca_reference(x, y, wa1, wa2, wm1, wm2):
    """Pure-JAX reference mirroring the PyTorch forward exactly."""
    B, C = x.shape[0], x.shape[1]
    xy = jnp.concatenate([x, y], axis=1)                         # (B, 2C, H, W)
    avg = jnp.mean(xy, axis=(2, 3))                              # (B, 2C)
    mx = jnp.max(xy, axis=(2, 3))                                # (B, 2C)
    wa1m, wa2m = wa1[:, :, 0, 0], wa2[:, :, 0, 0]
    wm1m, wm2m = wm1[:, :, 0, 0], wm2[:, :, 0, 0]
    avg_h = jax.nn.relu(avg @ wa1m.T)
    max_h = jax.nn.relu(mx @ wm1m.T)
    a = avg_h + max_h
    m = max_h + avg_h
    out = jax.nn.sigmoid(a @ wa2m.T + m @ wm2m.T)
    return out.reshape(B, C, 1, 1)


if __name__ == "__main__":
    # small shapes consistent with the module: in_ch=32 -> input_ch=64, hidden=4
    B, C, H, W = 2, 32, 16, 16
    input_ch = 2 * C
    hidden = input_ch // 16

    key = jax.random.PRNGKey(0)
    kx, ky, k1, k2, k3, k4, kx3, ky3 = jax.random.split(key, 8)

    x = jax.random.normal(kx, (B, C, H, W), dtype=jnp.float32)
    y = jax.random.normal(ky, (B, C, H, W), dtype=jnp.float32)

    # deterministic parameter init (Conv2d weight layout: (Cout, Cin, 1, 1))
    wa1 = 0.1 * jax.random.normal(k1, (hidden, input_ch, 1, 1), dtype=jnp.float32)
    wa2 = 0.1 * jax.random.normal(k2, (C, hidden, 1, 1), dtype=jnp.float32)
    wm1 = 0.1 * jax.random.normal(k3, (hidden, input_ch, 1, 1), dtype=jnp.float32)
    wm2 = 0.1 * jax.random.normal(k4, (C, hidden, 1, 1), dtype=jnp.float32)

    ref = jax.block_until_ready(ca_reference(x, y, wa1, wa2, wm1, wm2))

    # 1) default (auto-sized) spatial tile — single step at this small shape
    out = jax.block_until_ready(ca_forward(x, y, wa1, wa2, wm1, wm2))
    assert out.shape == (B, C, 1, 1), out.shape
    assert jnp.allclose(out, ref, atol=2e-5, rtol=1e-4), "mismatch (auto tile)"

    # 2) forced small tile — exercises the multi-step accumulator path
    out2 = jax.block_until_ready(ca_forward(x, y, wa1, wa2, wm1, wm2, hw_tile=128))
    assert jnp.allclose(out2, ref, atol=2e-5, rtol=1e-4), "mismatch (tiled)"

    # 3) non-128-divisible spatial size (14x14 -> HW=196) — masked tail tile
    H3 = W3 = 14
    x3 = jax.random.normal(kx3, (B, C, H3, W3), dtype=jnp.float32)
    y3 = jax.random.normal(ky3, (B, C, H3, W3), dtype=jnp.float32)
    ref3 = jax.block_until_ready(ca_reference(x3, y3, wa1, wa2, wm1, wm2))
    out3 = jax.block_until_ready(
        ca_forward(x3, y3, wa1, wa2, wm1, wm2, hw_tile=128))
    assert jnp.allclose(out3, ref3, atol=2e-5, rtol=1e-4), "mismatch (masked tail)"

    # 4) bf16 inputs — halves HBM read bytes; f32 accumulation in-kernel
    xb = x.astype(jnp.bfloat16)
    yb = y.astype(jnp.bfloat16)
    refb = jax.block_until_ready(
        ca_reference(xb.astype(jnp.float32), yb.astype(jnp.float32),
                     wa1, wa2, wm1, wm2))
    outb = jax.block_until_ready(ca_forward(xb, yb, wa1, wa2, wm1, wm2))
    assert outb.dtype == jnp.bfloat16, outb.dtype
    assert jnp.allclose(outb.astype(jnp.float32), refb, atol=1e-2, rtol=1e-2), \
        "mismatch (bf16)"

    print("KERNEL_OK")
</pallas_src>

<mosaic_0001>
module attributes {stable_mosaic.version = 11 : i64} {
  func.func @ca_kernel(%arg0: i32, %arg1: i32, %arg2: memref<1x32x256xf32, #tpu.memory_space<vmem>>, %arg3: memref<1x32x256xf32, #tpu.memory_space<vmem>>, %arg4: memref<4x64xf32, #tpu.memory_space<vmem>>, %arg5: memref<4x64xf32, #tpu.memory_space<vmem>>, %arg6: memref<32x4xf32, #tpu.memory_space<vmem>>, %arg7: memref<1x32x1xf32, #tpu.memory_space<vmem>>, %arg8: memref<64x1xf32, #tpu.memory_space<vmem>>, %arg9: memref<64x1xf32, #tpu.memory_space<vmem>>) attributes {dimension_semantics = [#tpu.dimension_semantics<parallel>, #tpu.dimension_semantics<arbitrary>], iteration_bounds = array<i64: 2, 1>, scalar_prefetch = 0 : i64, scratch_operands = 2 : i64, tpu.core_type = #tpu.core_type<tc>, window_params = [{transform_indices = @transform_0, window_bounds = array<i64: 1, 32, 256>}, {transform_indices = @transform_1, window_bounds = array<i64: 1, 32, 256>}, {pipeline_mode = #tpu.pipeline_mode<synchronous>, transform_indices = @transform_2, window_bounds = array<i64: 4, 64>}, {pipeline_mode = #tpu.pipeline_mode<synchronous>, transform_indices = @transform_3, window_bounds = array<i64: 4, 64>}, {pipeline_mode = #tpu.pipeline_mode<synchronous>, transform_indices = @transform_4, window_bounds = array<i64: 32, 4>}, {transform_indices = @transform_5, window_bounds = array<i64: 1, 32, 1>}]} {
    %c0 = arith.constant 0 : index
    %c0_0 = arith.constant 0 : index
    %c0_1 = arith.constant 0 : index
    %0 = vector.load %arg2[%c0, %c0_0, %c0_1] : memref<1x32x256xf32, #tpu.memory_space<vmem>>, vector<1x32x256xf32>
    %1 = vector.shape_cast %0 : vector<1x32x256xf32> to vector<32x256xf32>
    %c0_2 = arith.constant 0 : index
    %c0_3 = arith.constant 0 : index
    %c0_4 = arith.constant 0 : index
    %2 = vector.load %arg3[%c0_2, %c0_3, %c0_4] : memref<1x32x256xf32, #tpu.memory_space<vmem>>, vector<1x32x256xf32>
    %3 = vector.shape_cast %2 : vector<1x32x256xf32> to vector<32x256xf32>
    %c0_i32 = arith.constant 0 : i32
    %4 = arith.cmpi eq, %arg1, %c0_i32 : i32
    %5 = arith.extui %4 : i1 to i32
    %c0_i32_5 = arith.constant 0 : i32
    %6 = arith.cmpi ne, %5, %c0_i32_5 : i32
    scf.if %6 {
      %cst_26 = arith.constant 0.000000e+00 : f32
      %30 = vector.broadcast %cst_26 : f32 to vector<64x1xf32>
      %c0_27 = arith.constant 0 : index
      %c0_28 = arith.constant 0 : index
      %31 = vector.load %arg8[%c0_27, %c0_28] : memref<64x1xf32, #tpu.memory_space<vmem>>, vector<64x1xf32>
      tpu.vector_store %arg8[%c0_27, %c0_28], %30 {strides = array<i32>} : memref<64x1xf32, #tpu.memory_space<vmem>>, vector<64x1xf32>,
      %cst_29 = arith.constant 0xFF800000 : f32
      %32 = vector.broadcast %cst_29 : f32 to vector<64x1xf32>
      %c0_30 = arith.constant 0 : index
      %c0_31 = arith.constant 0 : index
      %33 = vector.load %arg9[%c0_30, %c0_31] : memref<64x1xf32, #tpu.memory_space<vmem>>, vector<64x1xf32>
      tpu.vector_store %arg9[%c0_30, %c0_31], %32 {strides = array<i32>} : memref<64x1xf32, #tpu.memory_space<vmem>>, vector<64x1xf32>,
    } else {
    }
    %c0_6 = arith.constant 0 : index
    %c0_7 = arith.constant 0 : index
    %7 = vector.load %arg8[%c0_6, %c0_7] : memref<64x1xf32, #tpu.memory_space<vmem>>, vector<32x1xf32>
    %cst = arith.constant dense<0.000000e+00> : vector<32xf32>
    %8 = vector.multi_reduction <add>, %1, %cst [1] : vector<32x256xf32> to vector<32xf32>
    %9 = vector.shape_cast %8 : vector<32xf32> to vector<32x1xf32>
    %10 = arith.addf %7, %9 : vector<32x1xf32>
    %c0_8 = arith.constant 0 : index
    %c0_9 = arith.constant 0 : index
    %11 = vector.load %arg8[%c0_8, %c0_9] : memref<64x1xf32, #tpu.memory_space<vmem>>, vector<32x1xf32>
    tpu.vector_store %arg8[%c0_8, %c0_9], %10 {strides = array<i32>} : memref<64x1xf32, #tpu.memory_space<vmem>>, vector<32x1xf32>,
    %c32 = arith.constant 32 : index
    %c0_10 = arith.constant 0 : index
    %12 = vector.load %arg8[%c32, %c0_10] : memref<64x1xf32, #tpu.memory_space<vmem>>, vector<32x1xf32>
    %cst_11 = arith.constant dense<0.000000e+00> : vector<32xf32>
    %13 = vector.multi_reduction <add>, %3, %cst_11 [1] : vector<32x256xf32> to vector<32xf32>
    %14 = vector.shape_cast %13 : vector<32xf32> to vector<32x1xf32>
    %15 = arith.addf %12, %14 : vector<32x1xf32>
    %c32_12 = arith.constant 32 : index
    %c0_13 = arith.constant 0 : index
    %16 = vector.load %arg8[%c32_12, %c0_13] : memref<64x1xf32, #tpu.memory_space<vmem>>, vector<32x1xf32>
    tpu.vector_store %arg8[%c32_12, %c0_13], %15 {strides = array<i32>} : memref<64x1xf32, #tpu.memory_space<vmem>>, vector<32x1xf32>,
    %c0_14 = arith.constant 0 : index
    %c0_15 = arith.constant 0 : index
    %17 = vector.load %arg9[%c0_14, %c0_15] : memref<64x1xf32, #tpu.memory_space<vmem>>, vector<32x1xf32>
    %cst_16 = arith.constant dense<0xFF800000> : vector<32xf32>
    %18 = vector.multi_reduction <maximumf>, %1, %cst_16 [1] : vector<32x256xf32> to vector<32xf32>
    %19 = vector.shape_cast %18 : vector<32xf32> to vector<32x1xf32>
    %20 = arith.maximumf %17, %19 : vector<32x1xf32>
    %c0_17 = arith.constant 0 : index
    %c0_18 = arith.constant 0 : index
    %21 = vector.load %arg9[%c0_17, %c0_18] : memref<64x1xf32, #tpu.memory_space<vmem>>, vector<32x1xf32>
    tpu.vector_store %arg9[%c0_17, %c0_18], %20 {strides = array<i32>} : memref<64x1xf32, #tpu.memory_space<vmem>>, vector<32x1xf32>,
    %c32_19 = arith.constant 32 : index
    %c0_20 = arith.constant 0 : index
    %22 = vector.load %arg9[%c32_19, %c0_20] : memref<64x1xf32, #tpu.memory_space<vmem>>, vector<32x1xf32>
    %cst_21 = arith.constant dense<0xFF800000> : vector<32xf32>
    %23 = vector.multi_reduction <maximumf>, %3, %cst_21 [1] : vector<32x256xf32> to vector<32xf32>
    %24 = vector.shape_cast %23 : vector<32xf32> to vector<32x1xf32>
    %25 = arith.maximumf %22, %24 : vector<32x1xf32>
    %c32_22 = arith.constant 32 : index
    %c0_23 = arith.constant 0 : index
    %26 = vector.load %arg9[%c32_22, %c0_23] : memref<64x1xf32, #tpu.memory_space<vmem>>, vector<32x1xf32>
    tpu.vector_store %arg9[%c32_22, %c0_23], %25 {strides = array<i32>} : memref<64x1xf32, #tpu.memory_space<vmem>>, vector<32x1xf32>,
    %c0_i32_24 = arith.constant 0 : i32
    %27 = arith.cmpi eq, %arg1, %c0_i32_24 : i32
    %28 = arith.extui %27 : i1 to i32
    %c0_i32_25 = arith.constant 0 : i32
    %29 = arith.cmpi ne, %28, %c0_i32_25 : i32
    scf.if %29 {
      %c0_26 = arith.constant 0 : index
      %c0_27 = arith.constant 0 : index
      %30 = vector.load %arg8[%c0_26, %c0_27] : memref<64x1xf32, #tpu.memory_space<vmem>>, vector<64x1xf32>
      %cst_28 = arith.constant 3.906250e-03 : f32
      %31 = vector.broadcast %cst_28 : f32 to vector<64x1xf32>
      %32 = arith.mulf %30, %31 : vector<64x1xf32>
      %c0_29 = arith.constant 0 : index
      %c0_30 = arith.constant 0 : index
      %33 = vector.load %arg9[%c0_29, %c0_30] : memref<64x1xf32, #tpu.memory_space<vmem>>, vector<64x1xf32>
      %c0_31 = arith.constant 0 : index
      %c0_32 = arith.constant 0 : index
      %34 = vector.load %arg4[%c0_31, %c0_32] : memref<4x64xf32, #tpu.memory_space<vmem>>, vector<4x64xf32>
      %cst_33 = arith.constant dense<0.000000e+00> : vector<4x1xf32>
      %35 = tpu.matmul %34, %32, %cst_33 {dimension_numbers = #tpu.dot_dimension_numbers<[1], [0], [0], [1], [0, 0, 1, 1], [], []>} : vector<4x64xf32>, vector<64x1xf32>, vector<4x1xf32> -> vector<4x1xf32>
      %cst_34 = arith.constant 0.000000e+00 : f32
      %36 = vector.broadcast %cst_34 : f32 to vector<4x1xf32>
      %37 = arith.maximumf %35, %36 : vector<4x1xf32>
      %c0_35 = arith.constant 0 : index
      %c0_36 = arith.constant 0 : index
      %38 = vector.load %arg5[%c0_35, %c0_36] : memref<4x64xf32, #tpu.memory_space<vmem>>, vector<4x64xf32>
      %cst_37 = arith.constant dense<0.000000e+00> : vector<4x1xf32>
      %39 = tpu.matmul %38, %33, %cst_37 {dimension_numbers = #tpu.dot_dimension_numbers<[1], [0], [0], [1], [0, 0, 1, 1], [], []>} : vector<4x64xf32>, vector<64x1xf32>, vector<4x1xf32> -> vector<4x1xf32>
      %cst_38 = arith.constant 0.000000e+00 : f32
      %40 = vector.broadcast %cst_38 : f32 to vector<4x1xf32>
      %41 = arith.maximumf %39, %40 : vector<4x1xf32>
      %42 = arith.addf %37, %41 : vector<4x1xf32>
      %c0_39 = arith.constant 0 : index
      %c0_40 = arith.constant 0 : index
      %43 = vector.load %arg6[%c0_39, %c0_40] : memref<32x4xf32, #tpu.memory_space<vmem>>, vector<32x4xf32>
      %cst_41 = arith.constant dense<0.000000e+00> : vector<32x1xf32>
      %44 = tpu.matmul %43, %42, %cst_41 {dimension_numbers = #tpu.dot_dimension_numbers<[1], [0], [0], [1], [0, 0, 1, 1], [], []>} : vector<32x4xf32>, vector<4x1xf32>, vector<32x1xf32> -> vector<32x1xf32>
      %45 = arith.negf %44 : vector<32x1xf32>
      %46 = math.exp %45 : vector<32x1xf32>
      %cst_42 = arith.constant 1.000000e+00 : f32
      %47 = vector.broadcast %cst_42 : f32 to vector<32x1xf32>
      %48 = arith.addf %47, %46 : vector<32x1xf32>
      %49 = arith.divf %47, %48 : vector<32x1xf32>
      %c0_43 = arith.constant 0 : index
      %c0_44 = arith.constant 0 : index
      %c0_45 = arith.constant 0 : index
      %50 = vector.load %arg7[%c0_43, %c0_44, %c0_45] : memref<1x32x1xf32, #tpu.memory_space<vmem>>, vector<1x32x1xf32>
      %51 = vector.shape_cast %50 : vector<1x32x1xf32> to vector<32x1xf32>
      %52 = vector.shape_cast %49 : vector<32x1xf32> to vector<1x32x1xf32>
      tpu.vector_store %arg7[%c0_43, %c0_44, %c0_45], %52 {strides = array<i32>} : memref<1x32x1xf32, #tpu.memory_space<vmem>>, vector<1x32x1xf32>,
    } else {
    }
    return
  }
  func.func @transform_0(%arg0: i32, %arg1: i32) -> (i32, i32, i32) {
    %c0_i32 = arith.constant 0 : i32
    %c0_i32_0 = arith.constant 0 : i32
    return %arg0, %c0_i32, %arg1 : i32, i32, i32
  }
  func.func @transform_1(%arg0: i32, %arg1: i32) -> (i32, i32, i32) {
    %c0_i32 = arith.constant 0 : i32
    %c0_i32_0 = arith.constant 0 : i32
    return %arg0, %c0_i32, %arg1 : i32, i32, i32
  }
  func.func @transform_2(%arg0: i32, %arg1: i32) -> (i32, i32) {
    %c0_i32 = arith.constant 0 : i32
    %c0_i32_0 = arith.constant 0 : i32
    %c0_i32_1 = arith.constant 0 : i32
    return %c0_i32, %c0_i32_0 : i32, i32
  }
  func.func @transform_3(%arg0: i32, %arg1: i32) -> (i32, i32) {
    %c0_i32 = arith.constant 0 : i32
    %c0_i32_0 = arith.constant 0 : i32
    %c0_i32_1 = arith.constant 0 : i32
    return %c0_i32, %c0_i32_0 : i32, i32
  }
  func.func @transform_4(%arg0: i32, %arg1: i32) -> (i32, i32) {
    %c0_i32 = arith.constant 0 : i32
    %c0_i32_0 = arith.constant 0 : i32
    %c0_i32_1 = arith.constant 0 : i32
    return %c0_i32, %c0_i32_0 : i32, i32
  }
  func.func @transform_5(%arg0: i32, %arg1: i32) -> (i32, i32, i32) {
    %c0_i32 = arith.constant 0 : i32
    %c0_i32_0 = arith.constant 0 : i32
    %c0_i32_1 = arith.constant 0 : i32
    return %arg0, %c0_i32, %c0_i32_0 : i32, i32, i32
  }
}

</mosaic_0001>

<llo_original>
// kernel: tpu_custom_call.1
$region0: #{tpu_custom_call.1}
  #allocation0 [shape = 'u32[]', space=smem, size = 0x4, offset = 0x4, fixed_abs, tag = 'smem constant byte address 0x4 - core index']
  #allocation1 [shape = 'u32[144,128]{1,0:T(1,128)}', space=vmem, size = 0x12000, scoped, tag = 'internal scratch']
  #allocation2 [shape = 'f32[64,1]{1,0:T(8,128)}', space=vmem, size = 0x8000, scoped, tag = 'scratch operand']
  #allocation3 [shape = 'f32[64,1]{1,0:T(8,128)}', space=vmem, size = 0x8000, scoped, tag = 'scratch operand']
  %s0 = inlined_call_operand.hbm [shape: f32[2,32,256], index: 0, kind: input, shape index: {}]
  %s1 = inlined_call_operand.hbm [shape: f32[2,32,256], index: 1, kind: input, shape index: {}]
  %s2 = inlined_call_operand.vmem [shape: f32[4,64], index: 2, kind: input, shape index: {}]
  %s3 = inlined_call_operand.vmem [shape: f32[4,64], index: 3, kind: input, shape index: {}]
  %s4 = inlined_call_operand.vmem [shape: f32[32,4], index: 4, kind: input, shape index: {}]
  %s5 = inlined_call_operand.vmem [shape: f32[2,32,1], index: 5, kind: output, shape index: {}]
  %s6 = sld [smem:[#allocation0]]
  $region69: #{tpu_custom_call.1} parent=0
    _
  %s8 = ssub.s32 1, %s6
  %s9 = scalar_select 0, %s8, %s6
  $region1: #{tpu_custom_call.1} parent=0
    #allocation4 [shape = 'u8[65536]{0}', space=vmem, size = 0x10000, scoped, tag = 'input window, operand 0']
    #allocation5 [shape = 's32[2]{0}', space=sflag, size = 0x8, scoped, tag = 'scoped memory for tpu_custom_call.1']
    #allocation6 [shape = 'u8[65536]{0}', space=vmem, size = 0x10000, scoped, tag = 'input window, operand 1']
    #allocation7 [shape = 's32[2]{0}', space=sflag, size = 0x8, scoped, tag = 'scoped memory for tpu_custom_call.1']
    %10 = vsyncpa [#allocation5], 0
    %s11 = scalar_lea.sflag [#allocation5], 1
    %12 = vsyncpa %s11, 0
    %13 = vsyncpa [#allocation7], 0
    %s14 = scalar_lea.sflag [#allocation7], 1
    %15 = vsyncpa %s14, 0
    loop: start=0, step=1, limit=4
    $region2: #{tpu_custom_call.1} parent=1 // loop_pre_header
      _
    $region3: #{tpu_custom_call.1} parent=1 // loop_header
      %s17 = sphi 0, %s21
      %p18 = scmp.ge.s32.totalorder %s17, 4
      %s24 = sphi 0, %s36
      %s25 = sphi 0, %s32
      %s26 = sphi 0, %s24
      %s27 = sphi 0, %s25
      %s28 = sphi 0, %s26
      %s29 = sphi 0, %s27
      %s41 = sphi 0, %s43
      %s44 = sphi 0, %s41
      %s45 = sphi 0, %s44
      %s61 = sphi 0, %s45
      %s69 = sphi 0, %s71
      %s72 = sphi 0, %s69
      %s73 = sphi 0, %s72
      %s89 = sphi 0, %s73
      %s93 = sphi 0, %s93
      %s95 = sphi 0, %s93
      %s96 = sphi 0, %s95
      %s110 = sphi 0, %s96
      %s114 = sphi 0, %s114
      %s116 = sphi 0, %s114
      %s117 = sphi 0, %s116
      %s131 = sphi 0, %s117
      %s135 = sphi 0, %s135
      %s137 = sphi 0, %s135
      %s138 = sphi 0, %s137
      %s152 = sphi 0, %s138
      %s158 = sphi 0, %s160
      %s161 = sphi 0, %s158
      %s162 = sphi 0, %s161
      %s178 = sphi 0, %s162
    $region4: #{tpu_custom_call.1} parent=1 // loop_header_branch
      %20 = sbr.rel (%p18) target = $region8
    $region5: #{tpu_custom_call.1} parent=1 // loop_body
      %s22 = ssub.s32 %s17, 1
      %s23 = ssub.s32 %s17, 2
      %s30 = sadd.s32 1, %s25
      %p31 = scmp.ge.s32.totalorder %s30, 1
      %s32 = scalar_select %p31, 0, %s30
      %s33 = sadd.s32 1, %s24
      %s34 = scalar_select %p31, %s33, %s24
      %p35 = scmp.ge.s32.totalorder %s34, 2
      %s36 = scalar_select %p35, 0, %s34
      %s37 = ssub.s32 %s24, %s36
      %s38 = ssub.s32 %s25, %s32
      %s39 = sor.u32 %s37, %s38
      %p40 = scmp.eq.s32.totalorder %s39, 0
      %s42 = sadd.s32 %s41, 1
      %s43 = scalar_select %p40, %s41, %s42
      %p46 = pneg %p40
      %p47 = scmp.eq.s32.totalorder %s17, 1
      %p48 = por %p46, %p47
      %p49 = scmp.ne.s32.totalorder %s41, %s44
      %p50 = scmp.eq.s32.totalorder %s17, 0
      %p51 = por %p49, %p50
      %p52 = scmp.ne.s32.totalorder %s41, %s44
      %p53 = scmp.eq.s32.totalorder %s22, 1
      %p54 = por %p52, %p53
      %p55 = scmp.ne.s32.totalorder %s44, %s45
      %p56 = scmp.eq.s32.totalorder %s22, 0
      %p57 = por %p55, %p56
      %p58 = scmp.ne.s32.totalorder %s44, %s45
      %p59 = scmp.eq.s32.totalorder %s23, 1
      %p60 = por %p58, %p59
      %p62 = scmp.ne.s32.totalorder %s45, %s61
      %p63 = scmp.eq.s32.totalorder %s23, 0
      %p64 = por %p62, %p63
      %s65 = ssub.s32 %s24, %s36
      %s66 = ssub.s32 %s25, %s32
      %s67 = sor.u32 %s65, %s66
      %p68 = scmp.eq.s32.totalorder %s67, 0
      %s70 = sadd.s32 %s69, 1
      %s71 = scalar_select %p68, %s69, %s70
      %p74 = pneg %p68
      %p75 = scmp.eq.s32.totalorder %s17, 1
      %p76 = por %p74, %p75
      %p77 = scmp.ne.s32.totalorder %s69, %s72
      %p78 = scmp.eq.s32.totalorder %s17, 0
      %p79 = por %p77, %p78
      %p80 = scmp.ne.s32.totalorder %s69, %s72
      %p81 = scmp.eq.s32.totalorder %s22, 1
      %p82 = por %p80, %p81
      %p83 = scmp.ne.s32.totalorder %s72, %s73
      %p84 = scmp.eq.s32.totalorder %s22, 0
      %p85 = por %p83, %p84
      %p86 = scmp.ne.s32.totalorder %s72, %s73
      %p87 = scmp.eq.s32.totalorder %s23, 1
      %p88 = por %p86, %p87
      %p90 = scmp.ne.s32.totalorder %s73, %s89
      %p91 = scmp.eq.s32.totalorder %s23, 0
      %p92 = por %p90, %p91
      %s94 = sadd.s32 %s93, 1
      %p97 = scmp.eq.s32.totalorder %s17, 1
      %p98 = scmp.ne.s32.totalorder %s93, %s95
      %p99 = scmp.eq.s32.totalorder %s17, 0
      %p100 = por %p98, %p99
      %p101 = scmp.ne.s32.totalorder %s93, %s95
      %p102 = scmp.eq.s32.totalorder %s22, 1
      %p103 = por %p101, %p102
      %p104 = scmp.ne.s32.totalorder %s95, %s96
      %p105 = scmp.eq.s32.totalorder %s22, 0
      %p106 = por %p104, %p105
      %p107 = scmp.ne.s32.totalorder %s95, %s96
      %p108 = scmp.eq.s32.totalorder %s23, 1
      %p109 = por %p107, %p108
      %p111 = scmp.ne.s32.totalorder %s96, %s110
      %p112 = scmp.eq.s32.totalorder %s23, 0
      %p113 = por %p111, %p112
      %s115 = sadd.s32 %s114, 1
      %p118 = scmp.eq.s32.totalorder %s17, 1
      %p119 = scmp.ne.s32.totalorder %s114, %s116
      %p120 = scmp.eq.s32.totalorder %s17, 0
      %p121 = por %p119, %p120
      %p122 = scmp.ne.s32.totalorder %s114, %s116
      %p123 = scmp.eq.s32.totalorder %s22, 1
      %p124 = por %p122, %p123
      %p125 = scmp.ne.s32.totalorder %s116, %s117
      %p126 = scmp.eq.s32.totalorder %s22, 0
      %p127 = por %p125, %p126
      %p128 = scmp.ne.s32.totalorder %s116, %s117
      %p129 = scmp.eq.s32.totalorder %s23, 1
      %p130 = por %p128, %p129
      %p132 = scmp.ne.s32.totalorder %s117, %s131
      %p133 = scmp.eq.s32.totalorder %s23, 0
      %p134 = por %p132, %p133
      %s136 = sadd.s32 %s135, 1
      %p139 = scmp.eq.s32.totalorder %s17, 1
      %p140 = scmp.ne.s32.totalorder %s135, %s137
      %p141 = scmp.eq.s32.totalorder %s17, 0
      %p142 = por %p140, %p141
      %p143 = scmp.ne.s32.totalorder %s135, %s137
      %p144 = scmp.eq.s32.totalorder %s22, 1
      %p145 = por %p143, %p144
      %p146 = scmp.ne.s32.totalorder %s137, %s138
      %p147 = scmp.eq.s32.totalorder %s22, 0
      %p148 = por %p146, %p147
      %p149 = scmp.ne.s32.totalorder %s137, %s138
      %p150 = scmp.eq.s32.totalorder %s23, 1
      %p151 = por %p149, %p150
      %p153 = scmp.ne.s32.totalorder %s138, %s152
      %p154 = scmp.eq.s32.totalorder %s23, 0
      %p155 = por %p153, %p154
      %s156 = ssub.s32 %s24, %s36
      %p157 = scmp.eq.s32.totalorder %s156, 0
      %s159 = sadd.s32 %s158, 1
      %s160 = scalar_select %p157, %s158, %s159
      %p163 = pneg %p157
      %p164 = scmp.eq.s32.totalorder %s17, 1
      %p165 = por %p163, %p164
      %p166 = scmp.ne.s32.totalorder %s158, %s161
      %p167 = scmp.eq.s32.totalorder %s17, 0
      %p168 = por %p166, %p167
      %p169 = scmp.ne.s32.totalorder %s158, %s161
      %p170 = scmp.eq.s32.totalorder %s22, 1
      %p171 = por %p169, %p170
      %p172 = scmp.ne.s32.totalorder %s161, %s162
      %p173 = scmp.eq.s32.totalorder %s22, 0
      %p174 = por %p172, %p173
      %p175 = scmp.ne.s32.totalorder %s161, %s162
      %p176 = scmp.eq.s32.totalorder %s23, 1
      %p177 = por %p175, %p176
      %p179 = scmp.ne.s32.totalorder %s162, %s178
      %p180 = scmp.eq.s32.totalorder %s23, 0
      %p181 = por %p179, %p180
      %p182 = scmp.le.s32.totalorder 1, %s17
      %p183 = scmp.lt.s32.totalorder %s17, 3
      %p184 = pnand %p182, %p183
      %p185 = pneg %p184
      // Predicated region
      $region9: #{tpu_custom_call.1} parent=5 // pred_check
        _
      $region10: #{tpu_custom_call.1} parent=5 // pred_check_branch
        %187 = sbr.rel (%p184) target = $region12
      $region11: #{tpu_custom_call.1} parent=5 // pred_region
        %s188 = ssub.s32 %s17, 1
        // Predicated region
        $region13: #{tpu_custom_call.1} parent=11 // pred_check
          %p189 = pneg %p106
        $region14: #{tpu_custom_call.1} parent=11 // pred_check_branch
          %191 = sbr.rel (%p189) target = $region16
        $region15: #{tpu_custom_call.1} parent=11 // pred_region
          _
        $region16: #{tpu_custom_call.1} parent=11 // pred_fallthru
          _
        // Predicated region
        $region17: #{tpu_custom_call.1} parent=11 // pred_check
          %p192 = pneg %p127
        $region18: #{tpu_custom_call.1} parent=11 // pred_check_branch
          %194 = sbr.rel (%p192) target = $region20
        $region19: #{tpu_custom_call.1} parent=11 // pred_region
          _
        $region20: #{tpu_custom_call.1} parent=11 // pred_fallthru
          _
        // Predicated region
        $region21: #{tpu_custom_call.1} parent=11 // pred_check
          %p195 = pneg %p148
        $region22: #{tpu_custom_call.1} parent=11 // pred_check_branch
          %197 = sbr.rel (%p195) target = $region24
        $region23: #{tpu_custom_call.1} parent=11 // pred_region
          _
        $region24: #{tpu_custom_call.1} parent=11 // pred_fallthru
          _
      $region12: #{tpu_custom_call.1} parent=5 // pred_fallthru
        _
      %p198 = scmp.lt.s32.totalorder %s17, 2
      // Predicated region
      $region25: #{tpu_custom_call.1} parent=5 // pred_check
        %p199 = pneg %p198
      $region26: #{tpu_custom_call.1} parent=5 // pred_check_branch
        %201 = sbr.rel (%p199) target = $region28
      $region27: #{tpu_custom_call.1} parent=5 // pred_region
        // Predicated region
        $region29: #{tpu_custom_call.1} parent=27 // pred_check
          %p202 = pneg %p51
        $region30: #{tpu_custom_call.1} parent=27 // pred_check_branch
          %204 = sbr.rel (%p202) target = $region32
        $region31: #{tpu_custom_call.1} parent=27 // pred_region
          %s205 = sand.u32 %s41, 1
          %s206 = scalar_lea.sflag [#allocation5], %s205
          %s207 = sand.u32 %s41, 1
          %s208 = smul.addr %s207, 64
          %s209 = scalar_lea.vmem [#allocation4], %s208
          %s210 = smul.u32 2, %s25
          %s212 = ssub.s32 1024, 1024
          %213 = vsyncadd %s206, %s212
          %s214 = smul.addr %s24, 8
          %s215 = sadd.s32 %s210, %s214
          %s216 = smul.addr %s215, 128
          %s217 = scalar_lea.hbm %s0, %s216
          %s218 = sshll.u32 %s209, 4
          %s219 = int_to_ptr.vmem [resolvable:$true] %s218
          %224 = dma.hbm_to_vmem [thread:$0]  %s217, 1024, %s219, %s206, 256, 256, 16
        $region32: #{tpu_custom_call.1} parent=27 // pred_fallthru
          _
        // Predicated region
        $region33: #{tpu_custom_call.1} parent=27 // pred_check
          %p225 = pneg %p79
        $region34: #{tpu_custom_call.1} parent=27 // pred_check_branch
          %227 = sbr.rel (%p225) target = $region36
        $region35: #{tpu_custom_call.1} parent=27 // pred_region
          %s228 = sand.u32 %s69, 1
          %s229 = scalar_lea.sflag [#allocation7], %s228
          %s230 = sand.u32 %s69, 1
          %s231 = smul.addr %s230, 64
          %s232 = scalar_lea.vmem [#allocation6], %s231
          %s233 = smul.u32 2, %s25
          %s235 = ssub.s32 1024, 1024
          %236 = vsyncadd %s229, %s235
          %s237 = smul.addr %s24, 8
          %s238 = sadd.s32 %s233, %s237
          %s239 = smul.addr %s238, 128
          %s240 = scalar_lea.hbm %s1, %s239
          %s241 = sshll.u32 %s232, 4
          %s242 = int_to_ptr.vmem [resolvable:$true] %s241
          %247 = dma.hbm_to_vmem [thread:$0]  %s240, 1024, %s242, %s229, 256, 256, 16
        $region36: #{tpu_custom_call.1} parent=27 // pred_fallthru
          _
      $region28: #{tpu_custom_call.1} parent=5 // pred_fallthru
        _
      %p248 = scmp.le.s32.totalorder 1, %s17
      %p249 = scmp.lt.s32.totalorder %s17, 3
      %p250 = pnand %p248, %p249
      %p251 = pneg %p250
      // Predicated region
      $region37: #{tpu_custom_call.1} parent=5 // pred_check
        _
      $region38: #{tpu_custom_call.1} parent=5 // pred_check_branch
        %253 = sbr.rel (%p250) target = $region40
      $region39: #{tpu_custom_call.1} parent=5 // pred_region
        %s254 = ssub.s32 %s17, 1
        %s255 = sand.u32 %s44, 1
        %s256 = scalar_lea.sflag [#allocation5], %s255
        %s257 = sand.u32 %s44, 1
        %s258 = smul.addr %s257, 64
        %s259 = scalar_lea.vmem [#allocation4], %s258
        // Predicated region
        $region41: #{tpu_custom_call.1} parent=39 // pred_check
          %p260 = pneg %p57
        $region42: #{tpu_custom_call.1} parent=39 // pred_check_branch
          %262 = sbr.rel (%p260) target = $region44
        $region43: #{tpu_custom_call.1} parent=39 // pred_region
          %263 = dma.done %s256, 1024
        $region44: #{tpu_custom_call.1} parent=39 // pred_fallthru
          _
        %s264 = sand.u32 %s72, 1
        %s265 = scalar_lea.sflag [#allocation7], %s264
        %s266 = sand.u32 %s72, 1
        %s267 = smul.addr %s266, 64
        %s268 = scalar_lea.vmem [#allocation6], %s267
        // Predicated region
        $region45: #{tpu_custom_call.1} parent=39 // pred_check
          %p269 = pneg %p85
        $region46: #{tpu_custom_call.1} parent=39 // pred_check_branch
          %271 = sbr.rel (%p269) target = $region48
        $region47: #{tpu_custom_call.1} parent=39 // pred_region
          %272 = dma.done %s265, 1024
        $region48: #{tpu_custom_call.1} parent=39 // pred_fallthru
          _
        %s273 = sand.u32 %s44, 1
        %s274 = scalar_lea.sflag [#allocation5], %s273
        %s275 = sand.u32 %s44, 1
        %s276 = smul.addr %s275, 64
        %s277 = scalar_lea.vmem [#allocation4], %s276
        %p278 = pneg %p57
        %p279 = pneg %p54
        %s280 = sand.u32 %s72, 1
        %s281 = scalar_lea.sflag [#allocation7], %s280
        %s282 = sand.u32 %s72, 1
        %s283 = smul.addr %s282, 64
        %s284 = scalar_lea.vmem [#allocation6], %s283
        %p285 = pneg %p85
        %p286 = pneg %p82
        %p287 = pneg %p106
        %p288 = pneg %p103
        %p289 = pneg %p127
        %p290 = pneg %p124
        %p291 = pneg %p148
        %p292 = pneg %p145
        %p293 = pneg %p174
        %p294 = pneg %p171
        %p295 = scmp.lt.s32.totalorder %s26, 1
        %s296 = scalar_select %p295, %s26, 1
        %s297 = smul.addr %s296, 4
        %s298 = smul.addr %s297, 8
        %s299 = scalar_lea.vmem %s5, %s298
        %s300 = smul.u32 2, %s27
        %s301 = smul.u32 2, %s27
        %p302 = scmp.lt.s32.totalorder %s26, 1
        %s303 = scalar_select %p302, %s26, 1
        %s304 = smul.addr %s303, 4
        %s305 = smul.addr %s304, 8
        %s306 = scalar_lea.vmem %s5, %s305
        %v307 = vld [vmem:[%s259] sm:$0xff]
        %v308 = vld [vmem:[%s259 + $0x8] sm:$0xff]
        %v309 = vld [vmem:[%s259 + $0x10] sm:$0xff]
        %v310 = vld [vmem:[%s259 + $0x18] sm:$0xff]
        %v311 = vld [vmem:[%s259 + $0x20] sm:$0xff]
        %v312 = vld [vmem:[%s259 + $0x28] sm:$0xff]
        %v313 = vld [vmem:[%s259 + $0x30] sm:$0xff]
        %v314 = vld [vmem:[%s259 + $0x38] sm:$0xff]
        %v315 = vld [vmem:[%s268] sm:$0xff]
        %v316 = vld [vmem:[%s268 + $0x8] sm:$0xff]
        %v317 = vld [vmem:[%s268 + $0x10] sm:$0xff]
        %v318 = vld [vmem:[%s268 + $0x18] sm:$0xff]
        %v319 = vld [vmem:[%s268 + $0x20] sm:$0xff]
        %v320 = vld [vmem:[%s268 + $0x28] sm:$0xff]
        %v321 = vld [vmem:[%s268 + $0x30] sm:$0xff]
        %v322 = vld [vmem:[%s268 + $0x38] sm:$0xff]
        %p323 = scmp.eq.s32.totalorder %s27, 0
        // Predicated region
        $region49: #{tpu_custom_call.1} parent=39 // pred_check
          %p324 = pneg %p323
        $region50: #{tpu_custom_call.1} parent=39 // pred_check_branch
          %326 = sbr.rel (%p324) target = $region52
        $region51: #{tpu_custom_call.1} parent=39 // pred_region
          %vm327 = vcmask 7168
          %328 = vst.msk [vmem:[#allocation2] sm:$0xff] %vm327, 0.0
          %329 = vst.msk [vmem:[#allocation2 + $0x8] sm:$0xff] %vm327, 0.0
          %330 = vst.msk [vmem:[#allocation2 + $0x10] sm:$0xff] %vm327, 0.0
          %331 = vst.msk [vmem:[#allocation2 + $0x18] sm:$0xff] %vm327, 0.0
          %332 = vst.msk [vmem:[#allocation2 + $0x20] sm:$0xff] %vm327, 0.0
          %333 = vst.msk [vmem:[#allocation2 + $0x28] sm:$0xff] %vm327, 0.0
          %334 = vst.msk [vmem:[#allocation2 + $0x30] sm:$0xff] %vm327, 0.0
          %335 = vst.msk [vmem:[#allocation2 + $0x38] sm:$0xff] %vm327, 0.0
          %336 = vst.msk [vmem:[#allocation3] sm:$0xff] %vm327, -inf
          %337 = vst.msk [vmem:[#allocation3 + $0x8] sm:$0xff] %vm327, -inf
          %338 = vst.msk [vmem:[#allocation3 + $0x10] sm:$0xff] %vm327, -inf
          %339 = vst.msk [vmem:[#allocation3 + $0x18] sm:$0xff] %vm327, -inf
          %340 = vst.msk [vmem:[#allocation3 + $0x20] sm:$0xff] %vm327, -inf
          %341 = vst.msk [vmem:[#allocation3 + $0x28] sm:$0xff] %vm327, -inf
          %342 = vst.msk [vmem:[#allocation3 + $0x30] sm:$0xff] %vm327, -inf
          %343 = vst.msk [vmem:[#allocation3 + $0x38] sm:$0xff] %vm327, -inf
        $region52: #{tpu_custom_call.1} parent=39 // pred_fallthru
          _
        %v344 = vld [vmem:[#allocation2] sm:$0xff]
        %v345 = vld [vmem:[#allocation2 + $0x8] sm:$0xff]
        %v346 = vld [vmem:[#allocation2 + $0x10] sm:$0xff]
        %v347 = vld [vmem:[#allocation2 + $0x18] sm:$0xff]
        %v348 = vadd.f32 %v307, %v308
        %349 = vadd.xlane.f32.xlu0 %v348
        %v350 = vpop.xlane.xlu0 %349
        %v351 = vadd.f32 %v309, %v310
        %352 = vadd.xlane.f32.xlu0 %v351
        %v353 = vpop.xlane.xlu0 %352
        %v354 = vadd.f32 %v311, %v312
        %355 = vadd.xlane.f32.xlu0 %v354
        %v356 = vpop.xlane.xlu0 %355
        %v357 = vadd.f32 %v313, %v314
        %358 = vadd.xlane.f32.xlu0 %v357
        %v359 = vpop.xlane.xlu0 %358
        %v360 = vadd.f32 %v344, %v350
        %v361 = vadd.f32 %v345, %v353
        %v362 = vadd.f32 %v346, %v356
        %v363 = vadd.f32 %v347, %v359
        %vm364 = vcmask 7168
        %365 = vst.msk [vmem:[#allocation2] sm:$0xff] %vm364, %v360
        %366 = vst.msk [vmem:[#allocation2 + $0x8] sm:$0xff] %vm364, %v361
        %367 = vst.msk [vmem:[#allocation2 + $0x10] sm:$0xff] %vm364, %v362
        %368 = vst.msk [vmem:[#allocation2 + $0x18] sm:$0xff] %vm364, %v363
        %v369 = vld [vmem:[#allocation2 + $0x20] sm:$0xff]
        %v370 = vld [vmem:[#allocation2 + $0x28] sm:$0xff]
        %v371 = vld [vmem:[#allocation2 + $0x30] sm:$0xff]
        %v372 = vld [vmem:[#allocation2 + $0x38] sm:$0xff]
        %v373 = vadd.f32 %v315, %v316
        %374 = vadd.xlane.f32.xlu0 %v373
        %v375 = vpop.xlane.xlu0 %374
        %v376 = vadd.f32 %v317, %v318
        %377 = vadd.xlane.f32.xlu0 %v376
        %v378 = vpop.xlane.xlu0 %377
        %v379 = vadd.f32 %v319, %v320
        %380 = vadd.xlane.f32.xlu0 %v379
        %v381 = vpop.xlane.xlu0 %380
        %v382 = vadd.f32 %v321, %v322
        %383 = vadd.xlane.f32.xlu0 %v382
        %v384 = vpop.xlane.xlu0 %383
        %v385 = vadd.f32 %v369, %v375
        %v386 = vadd.f32 %v370, %v378
        %v387 = vadd.f32 %v371, %v381
        %v388 = vadd.f32 %v372, %v384
        %389 = vst.msk [vmem:[#allocation2 + $0x20] sm:$0xff] %vm364, %v385
        %390 = vst.msk [vmem:[#allocation2 + $0x28] sm:$0xff] %vm364, %v386
        %391 = vst.msk [vmem:[#allocation2 + $0x30] sm:$0xff] %vm364, %v387
        %392 = vst.msk [vmem:[#allocation2 + $0x38] sm:$0xff] %vm364, %v388
        %v393 = vld [vmem:[#allocation3] sm:$0xff]
        %v394 = vld [vmem:[#allocation3 + $0x8] sm:$0xff]
        %v395 = vld [vmem:[#allocation3 + $0x10] sm:$0xff]
        %v396 = vld [vmem:[#allocation3 + $0x18] sm:$0xff]
        %v397 = vmax.f32 %v307, %v308
        %398 = vmax.xlane.f32.xlu0 %v397
        %v399 = vpop.xlane.xlu0 %398
        %v400 = vmax.f32 %v309, %v310
        %401 = vmax.xlane.f32.xlu0 %v400
        %v402 = vpop.xlane.xlu0 %401
        %v403 = vmax.f32 %v311, %v312
        %404 = vmax.xlane.f32.xlu0 %v403
        %v405 = vpop.xlane.xlu0 %404
        %v406 = vmax.f32 %v313, %v314
        %407 = vmax.xlane.f32.xlu0 %v406
        %v408 = vpop.xlane.xlu0 %407
        %v409 = vmax.f32 %v393, %v399
        %v410 = vmax.f32 %v394, %v402
        %v411 = vmax.f32 %v395, %v405
        %v412 = vmax.f32 %v396, %v408
        %413 = vst.msk [vmem:[#allocation3] sm:$0xff] %vm364, %v409
        %414 = vst.msk [vmem:[#allocation3 + $0x8] sm:$0xff] %vm364, %v410
        %415 = vst.msk [vmem:[#allocation3 + $0x10] sm:$0xff] %vm364, %v411
        %416 = vst.msk [vmem:[#allocation3 + $0x18] sm:$0xff] %vm364, %v412
        %v417 = vld [vmem:[#allocation3 + $0x20] sm:$0xff]
        %v418 = vld [vmem:[#allocation3 + $0x28] sm:$0xff]
        %v419 = vld [vmem:[#allocation3 + $0x30] sm:$0xff]
        %v420 = vld [vmem:[#allocation3 + $0x38] sm:$0xff]
        %v421 = vmax.f32 %v315, %v316
        %422 = vmax.xlane.f32.xlu0 %v421
        %v423 = vpop.xlane.xlu0 %422
        %v424 = vmax.f32 %v317, %v318
        %425 = vmax.xlane.f32.xlu0 %v424
        %v426 = vpop.xlane.xlu0 %425
        %v427 = vmax.f32 %v319, %v320
        %428 = vmax.xlane.f32.xlu0 %v427
        %v429 = vpop.xlane.xlu0 %428
        %v430 = vmax.f32 %v321, %v322
        %431 = vmax.xlane.f32.xlu0 %v430
        %v432 = vpop.xlane.xlu0 %431
        %v433 = vmax.f32 %v417, %v423
        %v434 = vmax.f32 %v418, %v426
        %v435 = vmax.f32 %v419, %v429
        %v436 = vmax.f32 %v420, %v432
        %437 = vst.msk [vmem:[#allocation3 + $0x20] sm:$0xff] %vm364, %v433
        %438 = vst.msk [vmem:[#allocation3 + $0x28] sm:$0xff] %vm364, %v434
        %439 = vst.msk [vmem:[#allocation3 + $0x30] sm:$0xff] %vm364, %v435
        %440 = vst.msk [vmem:[#allocation3 + $0x38] sm:$0xff] %vm364, %v436
        // Predicated region
        $region53: #{tpu_custom_call.1} parent=39 // pred_check
          %p441 = pneg %p323
        $region54: #{tpu_custom_call.1} parent=39 // pred_check_branch
          %443 = sbr.rel (%p441) target = $region56
        $region55: #{tpu_custom_call.1} parent=39 // pred_region
          %v444 = vld [vmem:[#allocation2] sm:$0xff]
          %v445 = vld [vmem:[#allocation2 + $0x8] sm:$0xff]
          %v446 = vld [vmem:[#allocation2 + $0x10] sm:$0xff]
          %v447 = vld [vmem:[#allocation2 + $0x18] sm:$0xff]
          %v448 = vld [vmem:[#allocation2 + $0x20] sm:$0xff]
          %v449 = vld [vmem:[#allocation2 + $0x28] sm:$0xff]
          %v450 = vld [vmem:[#allocation2 + $0x30] sm:$0xff]
          %v451 = vld [vmem:[#allocation2 + $0x38] sm:$0xff]
          %v452 = vmul.f32 %v444, 0.00390625
          %v453 = vmul.f32 %v445, 0.00390625
          %v454 = vmul.f32 %v446, 0.00390625
          %v455 = vmul.f32 %v447, 0.00390625
          %v456 = vmul.f32 %v448, 0.00390625
          %v457 = vmul.f32 %v449, 0.00390625
          %v458 = vmul.f32 %v450, 0.00390625
          %v459 = vmul.f32 %v451, 0.00390625
          %v460 = vld [vmem:[#allocation3] sm:$0xff]
          %v461 = vld [vmem:[#allocation3 + $0x8] sm:$0xff]
          %v462 = vld [vmem:[#allocation3 + $0x10] sm:$0xff]
          %v463 = vld [vmem:[#allocation3 + $0x18] sm:$0xff]
          %v464 = vld [vmem:[#allocation3 + $0x20] sm:$0xff]
          %v465 = vld [vmem:[#allocation3 + $0x28] sm:$0xff]
          %v466 = vld [vmem:[#allocation3 + $0x30] sm:$0xff]
          %v467 = vld [vmem:[#allocation3 + $0x38] sm:$0xff]
          %v468 = vld [vmem:[%s2] sm:$0xf]
          %vm469 = vcmask 523264
          %v471 = vsel %vm469, %v468, 0
          %473 = vmatprep.subr.mxu0 0.0
          %474 = vmatpush1.msra.mxu0 0.0
          %475 = vmatprep.subr.mxu0 0.0
          %476 = vmatpush1.msra.mxu0 0.0
          %477 = vmatprep.subr.mxu0 0.0
          %478 = vmatpush1.msra.mxu0 0.0
          %479 = vmatprep.subr.mxu0 0.0
          %480 = vmatpush1.msra.mxu0 0.0
          %481 = vmatprep.subr.mxu0 0.0
          %482 = vmatpush1.msra.mxu0 0.0
          %483 = vmatprep.subr.mxu0 0.0
          %484 = vmatpush1.msra.mxu0 0.0
          %485 = vmatprep.subr.mxu0 0.0
          %486 = vmatpush1.msra.mxu0 0.0
          %487 = vmatprep.subr.mxu0 0.0
          %488 = vmatpush1.msra.mxu0 0.0
          %489 = vmatprep.subr.mxu0 0.0
          %490 = vmatpush1.msra.mxu0 %v459
          %491 = vmatprep.subr.mxu0 0.0
          %492 = vmatpush1.msra.mxu0 %v458
          %493 = vmatprep.subr.mxu0 0.0
          %494 = vmatpush1.msra.mxu0 %v457
          %495 = vmatprep.subr.mxu0 0.0
          %496 = vmatpush1.msra.mxu0 %v456
          %497 = vmatprep.subr.mxu0 0.0
          %498 = vmatpush1.msra.mxu0 %v455
          %499 = vmatprep.subr.mxu0 0.0
          %500 = vmatpush1.msra.mxu0 %v454
          %501 = vmatprep.subr.mxu0 0.0
          %502 = vmatpush1.msra.mxu0 %v453
          %503 = vmatprep.subr.mxu0 0.0
          %504 = vmatpush1.msra.mxu0 %v452
          %505 = vmatprep.subr.mxu0 0.0
          %506 = vmatpush2.msra.mxu0 0.0
          %507 = vmatprep.subr.mxu0 0.0
          %508 = vmatpush2.msra.mxu0 0.0
          %509 = vmatprep.subr.mxu0 0.0
          %510 = vmatpush2.msra.mxu0 0.0
          %511 = vmatprep.subr.mxu0 0.0
          %512 = vmatpush2.msra.mxu0 0.0
          %513 = vmatprep.subr.mxu0 0.0
          %514 = vmatpush2.msra.mxu0 0.0
          %515 = vmatprep.subr.mxu0 0.0
          %516 = vmatpush2.msra.mxu0 0.0
          %517 = vmatprep.subr.mxu0 0.0
          %518 = vmatpush2.msra.mxu0 0.0
          %519 = vmatprep.subr.mxu0 0.0
          %520 = vmatpush2.msra.mxu0 0.0
          %521 = vmatprep.subr.mxu0 0.0
          %522 = vmatpush2.msra.mxu0 0.0
          %523 = vmatprep.subr.mxu0 0.0
          %524 = vmatpush2.msra.mxu0 0.0
          %525 = vmatprep.subr.mxu0 0.0
          %526 = vmatpush2.msra.mxu0 0.0
          %527 = vmatprep.subr.mxu0 0.0
          %528 = vmatpush2.msra.mxu0 0.0
          %529 = vmatprep.subr.mxu0 0.0
          %530 = vmatpush2.msra.mxu0 0.0
          %531 = vmatprep.subr.mxu0 0.0
          %532 = vmatpush2.msra.mxu0 0.0
          %533 = vmatprep.subr.mxu0 0.0
          %534 = vmatpush2.msra.mxu0 0.0
          %535 = vmatprep.subr.mxu0 0.0
          %536 = vmatpush2.msra.mxu0 0.0
          %537 = vmatprep.mubr.f32.mxu0 0.0
          %538 = vmatmul.mubr.f32.gmra.mxu0 %v471
          %v539 = vpop.f32.mrf.mxu0
          %v540 = vadd.f32 0.0, %v539
          %v541 = vpop.f32.mrf.mxu0
          %542 = vdwg.mxu0
          %v543 = vmax.f32 %v540, 0.0
          %v544 = vld [vmem:[%s3] sm:$0xf]
          %v546 = vsel %vm469, %v544, 0
          %548 = vmatprep.subr.mxu0 0.0
          %549 = vmatpush1.msra.mxu0 0.0
          %550 = vmatprep.subr.mxu0 0.0
          %551 = vmatpush1.msra.mxu0 0.0
          %552 = vmatprep.subr.mxu0 0.0
          %553 = vmatpush1.msra.mxu0 0.0
          %554 = vmatprep.subr.mxu0 0.0
          %555 = vmatpush1.msra.mxu0 0.0
          %556 = vmatprep.subr.mxu0 0.0
          %557 = vmatpush1.msra.mxu0 0.0
          %558 = vmatprep.subr.mxu0 0.0
          %559 = vmatpush1.msra.mxu0 0.0
          %560 = vmatprep.subr.mxu0 0.0
          %561 = vmatpush1.msra.mxu0 0.0
          %562 = vmatprep.subr.mxu0 0.0
          %563 = vmatpush1.msra.mxu0 0.0
          %564 = vmatprep.subr.mxu0 0.0
          %565 = vmatpush1.msra.mxu0 %v467
          %566 = vmatprep.subr.mxu0 0.0
          %567 = vmatpush1.msra.mxu0 %v466
          %568 = vmatprep.subr.mxu0 0.0
          %569 = vmatpush1.msra.mxu0 %v465
          %570 = vmatprep.subr.mxu0 0.0
          %571 = vmatpush1.msra.mxu0 %v464
          %572 = vmatprep.subr.mxu0 0.0
          %573 = vmatpush1.msra.mxu0 %v463
          %574 = vmatprep.subr.mxu0 0.0
          %575 = vmatpush1.msra.mxu0 %v462
          %576 = vmatprep.subr.mxu0 0.0
          %577 = vmatpush1.msra.mxu0 %v461
          %578 = vmatprep.subr.mxu0 0.0
          %579 = vmatpush1.msra.mxu0 %v460
          %580 = vmatprep.subr.mxu0 0.0
          %581 = vmatpush2.msra.mxu0 0.0
          %582 = vmatprep.subr.mxu0 0.0
          %583 = vmatpush2.msra.mxu0 0.0
          %584 = vmatprep.subr.mxu0 0.0
          %585 = vmatpush2.msra.mxu0 0.0
          %586 = vmatprep.subr.mxu0 0.0
          %587 = vmatpush2.msra.mxu0 0.0
          %588 = vmatprep.subr.mxu0 0.0
          %589 = vmatpush2.msra.mxu0 0.0
          %590 = vmatprep.subr.mxu0 0.0
          %591 = vmatpush2.msra.mxu0 0.0
          %592 = vmatprep.subr.mxu0 0.0
          %593 = vmatpush2.msra.mxu0 0.0
          %594 = vmatprep.subr.mxu0 0.0
          %595 = vmatpush2.msra.mxu0 0.0
          %596 = vmatprep.subr.mxu0 0.0
          %597 = vmatpush2.msra.mxu0 0.0
          %598 = vmatprep.subr.mxu0 0.0
          %599 = vmatpush2.msra.mxu0 0.0
          %600 = vmatprep.subr.mxu0 0.0
          %601 = vmatpush2.msra.mxu0 0.0
          %602 = vmatprep.subr.mxu0 0.0
          %603 = vmatpush2.msra.mxu0 0.0
          %604 = vmatprep.subr.mxu0 0.0
          %605 = vmatpush2.msra.mxu0 0.0
          %606 = vmatprep.subr.mxu0 0.0
          %607 = vmatpush2.msra.mxu0 0.0
          %608 = vmatprep.subr.mxu0 0.0
          %609 = vmatpush2.msra.mxu0 0.0
          %610 = vmatprep.subr.mxu0 0.0
          %611 = vmatpush2.msra.mxu0 0.0
          %612 = vmatprep.mubr.f32.mxu0 0.0
          %613 = vmatmul.mubr.f32.gmra.mxu0 %v546
          %v614 = vpop.f32.mrf.mxu0
          %v615 = vadd.f32 0.0, %v614
          %v616 = vpop.f32.mrf.mxu0
          %617 = vdwg.mxu0
          %v618 = vmax.f32 %v615, 0.0
          %v619 = vadd.f32 %v543, %v618
          %v620 = vld [vmem:[%s4] sm:$0xff]
          %v621 = vld [vmem:[%s4 + $0x8] sm:$0xff]
          %v622 = vld [vmem:[%s4 + $0x10] sm:$0xff]
          %v623 = vld [vmem:[%s4 + $0x18] sm:$0xff]
          %vm624 = vcmask 31744
          %v626 = vsel %vm624, %v620, 0
          %v629 = vsel %vm624, %v621, 0
          %v632 = vsel %vm624, %v622, 0
          %v635 = vsel %vm624, %v623, 0
          %vm637 = vcmask 1043456
          %v639 = vsel %vm637, %v619, 0
          %641 = vmatprep.subr.mxu0 0.0
          %642 = vmatpush1.msra.mxu0 0.0
          %643 = vmatprep.subr.mxu0 0.0
          %644 = vmatpush1.msra.mxu0 0.0
          %645 = vmatprep.subr.mxu0 0.0
          %646 = vmatpush1.msra.mxu0 0.0
          %647 = vmatprep.subr.mxu0 0.0
          %648 = vmatpush1.msra.mxu0 0.0
          %649 = vmatprep.subr.mxu0 0.0
          %650 = vmatpush1.msra.mxu0 0.0
          %651 = vmatprep.subr.mxu0 0.0
          %652 = vmatpush1.msra.mxu0 0.0
          %653 = vmatprep.subr.mxu0 0.0
          %654 = vmatpush1.msra.mxu0 0.0
          %655 = vmatprep.subr.mxu0 0.0
          %656 = vmatpush1.msra.mxu0 0.0
          %657 = vmatprep.subr.mxu0 0.0
          %658 = vmatpush1.msra.mxu0 0.0
          %659 = vmatprep.subr.mxu0 0.0
          %660 = vmatpush1.msra.mxu0 0.0
          %661 = vmatprep.subr.mxu0 0.0
          %662 = vmatpush1.msra.mxu0 0.0
          %663 = vmatprep.subr.mxu0 0.0
          %664 = vmatpush1.msra.mxu0 0.0
          %665 = vmatprep.subr.mxu0 0.0
          %666 = vmatpush1.msra.mxu0 0.0
          %667 = vmatprep.subr.mxu0 0.0
          %668 = vmatpush1.msra.mxu0 0.0
          %669 = vmatprep.subr.mxu0 0.0
          %670 = vmatpush1.msra.mxu0 0.0
          %671 = vmatprep.subr.mxu0 0.0
          %672 = vmatpush1.msra.mxu0 %v639
          %673 = vmatprep.subr.mxu0 0.0
          %674 = vmatpush2.msra.mxu0 0.0
          %675 = vmatprep.subr.mxu0 0.0
          %676 = vmatpush2.msra.mxu0 0.0
          %677 = vmatprep.subr.mxu0 0.0
          %678 = vmatpush2.msra.mxu0 0.0
          %679 = vmatprep.subr.mxu0 0.0
          %680 = vmatpush2.msra.mxu0 0.0
          %681 = vmatprep.subr.mxu0 0.0
          %682 = vmatpush2.msra.mxu0 0.0
          %683 = vmatprep.subr.mxu0 0.0
          %684 = vmatpush2.msra.mxu0 0.0
          %685 = vmatprep.subr.mxu0 0.0
          %686 = vmatpush2.msra.mxu0 0.0
          %687 = vmatprep.subr.mxu0 0.0
          %688 = vmatpush2.msra.mxu0 0.0
          %689 = vmatprep.subr.mxu0 0.0
          %690 = vmatpush2.msra.mxu0 0.0
          %691 = vmatprep.subr.mxu0 0.0
          %692 = vmatpush2.msra.mxu0 0.0
          %693 = vmatprep.subr.mxu0 0.0
          %694 = vmatpush2.msra.mxu0 0.0
          %695 = vmatprep.subr.mxu0 0.0
          %696 = vmatpush2.msra.mxu0 0.0
          %697 = vmatprep.subr.mxu0 0.0
          %698 = vmatpush2.msra.mxu0 0.0
          %699 = vmatprep.subr.mxu0 0.0
          %700 = vmatpush2.msra.mxu0 0.0
          %701 = vmatprep.subr.mxu0 0.0
          %702 = vmatpush2.msra.mxu0 0.0
          %703 = vmatprep.subr.mxu0 0.0
          %704 = vmatpush2.msra.mxu0 0.0
          %705 = vmatprep.mubr.f32.mxu0 0.0
          %706 = vmatmul.mubr.f32.gmra.mxu0 %v626
          %v707 = vpop.f32.mrf.mxu0
          %v708 = vadd.f32 0.0, %v707
          %v709 = vpop.f32.mrf.mxu0
          %710 = vmatprep.mubr.f32.mxu0 0.0
          %711 = vmatmul.mubr.f32.gmra.mxu0 %v629
          %v712 = vpop.f32.mrf.mxu0
          %v713 = vadd.f32 0.0, %v712
          %v714 = vpop.f32.mrf.mxu0
          %715 = vmatprep.mubr.f32.mxu0 0.0
          %716 = vmatmul.mubr.f32.gmra.mxu0 %v632
          %v717 = vpop.f32.mrf.mxu0
          %v718 = vadd.f32 0.0, %v717
          %v719 = vpop.f32.mrf.mxu0
          %720 = vmatprep.mubr.f32.mxu0 0.0
          %721 = vmatmul.mubr.f32.gmra.mxu0 %v635
          %v722 = vpop.f32.mrf.mxu0
          %v723 = vadd.f32 0.0, %v722
          %v724 = vpop.f32.mrf.mxu0
          %725 = vdwg.mxu0
          %v726 = vxor.u32 %v708, 2147483648
          %v727 = vxor.u32 %v713, 2147483648
          %v728 = vxor.u32 %v718, 2147483648
          %v729 = vxor.u32 %v723, 2147483648
          %v730 = vmul.f32 %v726, 1.442695
          %v731 = vpow.pop %v730
          %v732 = vmul.f32 %v727, 1.442695
          %v733 = vpow.pop %v732
          %v734 = vmul.f32 %v728, 1.442695
          %v735 = vpow.pop %v734
          %v736 = vmul.f32 %v729, 1.442695
          %v737 = vpow.pop %v736
          %v738 = vadd.f32 %v731, 1.0
          %v739 = vadd.f32 %v733, 1.0
          %v740 = vadd.f32 %v735, 1.0
          %v741 = vadd.f32 %v737, 1.0
          %v742 = vrcp.pop %v738
          %v743 = vmul.f32 1.0, %v742
          %v744 = vrcp.pop %v739
          %v745 = vmul.f32 1.0, %v744
          %v746 = vrcp.pop %v740
          %v747 = vmul.f32 1.0, %v746
          %v748 = vrcp.pop %v741
          %v749 = vmul.f32 1.0, %v748
          %750 = vst.msk [vmem:[%s306] sm:$0xff] %vm364, %v743
          %751 = vst.msk [vmem:[%s306 + $0x8] sm:$0xff] %vm364, %v745
          %752 = vst.msk [vmem:[%s306 + $0x10] sm:$0xff] %vm364, %v747
          %753 = vst.msk [vmem:[%s306 + $0x18] sm:$0xff] %vm364, %v749
        $region56: #{tpu_custom_call.1} parent=39 // pred_fallthru
          _
        %p754 = scmp.lt.s32.totalorder %s26, 1
        %s755 = scalar_select %p754, %s26, 1
        %s756 = smul.addr %s755, 4
        %s757 = smul.addr %s756, 8
        %s758 = scalar_lea.vmem %s5, %s757
        // Predicated region
        $region57: #{tpu_custom_call.1} parent=39 // pred_check
          %p759 = pneg %p171
        $region58: #{tpu_custom_call.1} parent=39 // pred_check_branch
          %761 = sbr.rel (%p759) target = $region60
        $region59: #{tpu_custom_call.1} parent=39 // pred_region
          _
        $region60: #{tpu_custom_call.1} parent=39 // pred_fallthru
          _
      $region40: #{tpu_custom_call.1} parent=5 // pred_fallthru
        _
      %p762 = scmp.le.s32.totalorder 2, %s17
      // Predicated region
      $region61: #{tpu_custom_call.1} parent=5 // pred_check
        %p763 = pneg %p762
      $region62: #{tpu_custom_call.1} parent=5 // pred_check_branch
        %765 = sbr.rel (%p763) target = $region64
      $region63: #{tpu_custom_call.1} parent=5 // pred_region
        %s766 = ssub.s32 %s17, 2
        // Predicated region
        $region65: #{tpu_custom_call.1} parent=63 // pred_check
          %p767 = pneg %p177
        $region66: #{tpu_custom_call.1} parent=63 // pred_check_branch
          %769 = sbr.rel (%p767) target = $region68
        $region67: #{tpu_custom_call.1} parent=63 // pred_region
          %p770 = scmp.lt.s32.totalorder %s28, 1
          %s771 = scalar_select %p770, %s28, 1
          %s772 = smul.addr %s771, 4
          %s773 = smul.addr %s772, 8
          %s774 = scalar_lea.vmem %s5, %s773
        $region68: #{tpu_custom_call.1} parent=63 // pred_fallthru
          _
      $region64: #{tpu_custom_call.1} parent=5 // pred_fallthru
        _
    $region6: #{tpu_custom_call.1} parent=1 // loop_footer
      %s21 = sadd.s32 1, %s17
    $region7: #{tpu_custom_call.1} parent=1 // loop_footer_branch
      %16 = sbr.rel target = $region3
    $region8: #{tpu_custom_call.1} parent=1 // loop_exit
      _
    %775 = vsyncpa [#allocation5], 1
    %s776 = scalar_lea.sflag [#allocation5], 1
    %777 = vsyncpa %s776, 1
    %778 = vsyncpa [#allocation7], 1
    %s779 = scalar_lea.sflag [#allocation7], 1
    %780 = vsyncpa %s779, 1

</llo_original>
